<compile_context>
chip_gen: v5e
topology: v5e:2x2
jax: 0.10.0
libtpu: 0.0.40
codegen_flags: <defaults>
</compile_context>

<pallas_src>
import jax
import jax.numpy as jnp
from jax.experimental import pallas as pl
from jax.experimental.pallas import tpu as pltpu

NEG_SLOPE = 3.0654767


def _conv1x1_leaky_kernel(x_ref, wb_ref, o_ref):
    # x_ref:  (N, Cin, HW)     whole problem, resident in VMEM
    # wb_ref: (Cout, Cin+1)    weight with bias packed as the last column
    # o_ref:  (N, Cout, HW)
    n, cin, hw = x_ref.shape
    cout = wb_ref.shape[0]

    w = wb_ref[:, :cin]            # (Cout, Cin)
    b = wb_ref[:, cin:cin + 1]     # (Cout, 1)

    # Hoisted: materialize the bias broadcast once, reuse for every batch elem.
    bias_tile = jnp.broadcast_to(b, (cout, hw))

    # N and Cin are tiny (2 each): fully unrolled VPU FMAs, no MXU.
    for i in range(n):
        xi = x_ref[i]              # (Cin, HW)
        acc = bias_tile
        for c in range(cin):
            # (Cout, 1) * (1, HW) -> (Cout, HW) broadcast multiply-add.
            acc = acc + w[:, c:c + 1] * xi[c:c + 1, :]
        # Leaky activation: where(v > 0, v, v * slope); f32 throughout.
        o_ref[i] = jnp.where(acc > 0, acc, acc * NEG_SLOPE)


def conv1x1_leaky(x_nchw, weight, bias):
    """x_nchw: (N, Cin, H, W) f32; weight: (Cout, Cin) f32; bias: (Cout,) f32.
    Returns (N, Cout, H, W) f32, matching the PyTorch module."""
    N, Cin, H, W = x_nchw.shape
    Cout = weight.shape[0]
    HW = H * W

    # Contiguous reshapes only (no HBM data movement).
    x3 = x_nchw.reshape(N, Cin, HW)
    wb = jnp.concatenate([weight, bias.reshape(Cout, 1)], axis=1)  # (Cout, Cin+1)

    flops = 2 * N * Cout * Cin * HW + 2 * N * Cout * HW
    bytes_accessed = 4 * (N * Cin * HW + Cout * (Cin + 1) + N * Cout * HW)

    # TODO(synk): if H*W ever grows large, add a spatial grid axis and size the
    # HW tile so (input block + output block) x 2 buffers stays under ~16-24 MiB
    # (fits v7x's 32 MiB scoped default / 64 MiB VMEM, and v5e/v6e for free).
    out3 = pl.pallas_call(
        _conv1x1_leaky_kernel,
        out_shape=jax.ShapeDtypeStruct((N, Cout, HW), jnp.float32),
        in_specs=[
            pl.BlockSpec(memory_space=pltpu.MemorySpace.VMEM),
            pl.BlockSpec(memory_space=pltpu.MemorySpace.VMEM),
        ],
        out_specs=pl.BlockSpec(memory_space=pltpu.MemorySpace.VMEM),
        cost_estimate=pl.CostEstimate(
            flops=flops, transcendentals=0, bytes_accessed=bytes_accessed),
    )(x3, wb)

    # Free reshape back to NCHW.
    return out3.reshape(N, Cout, H, W)


if __name__ == "__main__":
    key = jax.random.PRNGKey(0)
    kx, kw, kb = jax.random.split(key, 3)

    # Shapes consistent with Conv2d(2, 50, 1): N=2, Cin=2, H=W=16, Cout=50
    N, Cin, H, W, Cout = 2, 2, 16, 16, 50

    x = jax.random.normal(kx, (N, Cin, H, W), dtype=jnp.float32)
    weight = jax.random.normal(kw, (Cout, Cin), dtype=jnp.float32) * 0.1
    bias = jax.random.normal(kb, (Cout,), dtype=jnp.float32) * 0.1

    out = conv1x1_leaky(x, weight, bias)
    jax.block_until_ready(out)

    # Reference check in plain JAX (1x1 conv == channel matmul + bias + leaky).
    ref = jnp.einsum("nchw,oc->nohw", x, weight) + bias[None, :, None, None]
    ref = jnp.where(ref > 0, ref, ref * NEG_SLOPE)
    assert out.shape == (N, Cout, H, W)
    assert jnp.allclose(out, ref, atol=1e-4, rtol=1e-4)

    print("KERNEL_OK")
</pallas_src>

<mosaic_0001>
module attributes {stable_mosaic.version = 11 : i64} {
  func.func @_conv1x1_leaky_kernel(%arg0: memref<2x2x256xf32, #tpu.memory_space<vmem>>, %arg1: memref<50x3xf32, #tpu.memory_space<vmem>>, %arg2: memref<2x50x256xf32, #tpu.memory_space<vmem>>) attributes {dimension_semantics = [], scalar_prefetch = 0 : i64, scratch_operands = 0 : i64, tpu.core_type = #tpu.core_type<tc>} {
    %c0 = arith.constant 0 : index
    %c0_0 = arith.constant 0 : index
    %0 = vector.load %arg1[%c0, %c0_0] : memref<50x3xf32, #tpu.memory_space<vmem>>, vector<50x2xf32>
    %c0_1 = arith.constant 0 : index
    %c2 = arith.constant 2 : index
    %1 = vector.load %arg1[%c0_1, %c2] : memref<50x3xf32, #tpu.memory_space<vmem>>, vector<50x1xf32>
    %2 = vector.shape_cast %1 : vector<50x1xf32> to vector<50x1xf32>
    %3 = vector.broadcast %2 : vector<50x1xf32> to vector<50x256xf32>
    %c0_2 = arith.constant 0 : index
    %c0_3 = arith.constant 0 : index
    %c0_4 = arith.constant 0 : index
    %4 = vector.load %arg0[%c0_2, %c0_3, %c0_4] : memref<2x2x256xf32, #tpu.memory_space<vmem>>, vector<1x2x256xf32>
    %5 = vector.shape_cast %4 : vector<1x2x256xf32> to vector<2x256xf32>
    %6 = vector.extract_strided_slice %0 {offsets = [0, 0], sizes = [50, 1], strides = [1, 1]} : vector<50x2xf32> to vector<50x1xf32>
    %7 = vector.extract_strided_slice %5 {offsets = [0, 0], sizes = [1, 256], strides = [1, 1]} : vector<2x256xf32> to vector<1x256xf32>
    %8 = vector.broadcast %6 : vector<50x1xf32> to vector<50x256xf32>
    %9 = vector.broadcast %7 : vector<1x256xf32> to vector<50x256xf32>
    %10 = arith.mulf %8, %9 : vector<50x256xf32>
    %11 = arith.addf %3, %10 : vector<50x256xf32>
    %12 = vector.extract_strided_slice %0 {offsets = [0, 1], sizes = [50, 1], strides = [1, 1]} : vector<50x2xf32> to vector<50x1xf32>
    %13 = vector.extract_strided_slice %5 {offsets = [1, 0], sizes = [1, 256], strides = [1, 1]} : vector<2x256xf32> to vector<1x256xf32>
    %14 = vector.broadcast %12 : vector<50x1xf32> to vector<50x256xf32>
    %15 = vector.broadcast %13 : vector<1x256xf32> to vector<50x256xf32>
    %16 = arith.mulf %14, %15 : vector<50x256xf32>
    %17 = arith.addf %11, %16 : vector<50x256xf32>
    %cst = arith.constant 0.000000e+00 : f32
    %18 = vector.broadcast %cst : f32 to vector<50x256xf32>
    %19 = arith.cmpf ogt, %17, %18 : vector<50x256xf32>
    %cst_5 = arith.constant 3.06547666 : f32
    %20 = vector.broadcast %cst_5 : f32 to vector<50x256xf32>
    %21 = arith.mulf %17, %20 : vector<50x256xf32>
    %22 = arith.select %19, %17, %21 : vector<50x256xi1>, vector<50x256xf32>
    %c0_6 = arith.constant 0 : index
    %c0_7 = arith.constant 0 : index
    %c0_8 = arith.constant 0 : index
    %23 = vector.load %arg2[%c0_6, %c0_7, %c0_8] : memref<2x50x256xf32, #tpu.memory_space<vmem>>, vector<1x50x256xf32>
    %24 = vector.shape_cast %23 : vector<1x50x256xf32> to vector<50x256xf32>
    %25 = vector.shape_cast %22 : vector<50x256xf32> to vector<1x50x256xf32>
    tpu.vector_store %arg2[%c0_6, %c0_7, %c0_8], %25 {strides = array<i32>} : memref<2x50x256xf32, #tpu.memory_space<vmem>>, vector<1x50x256xf32>,
    %c1 = arith.constant 1 : index
    %c0_9 = arith.constant 0 : index
    %c0_10 = arith.constant 0 : index
    %26 = vector.load %arg0[%c1, %c0_9, %c0_10] : memref<2x2x256xf32, #tpu.memory_space<vmem>>, vector<1x2x256xf32>
    %27 = vector.shape_cast %26 : vector<1x2x256xf32> to vector<2x256xf32>
    %28 = vector.extract_strided_slice %0 {offsets = [0, 0], sizes = [50, 1], strides = [1, 1]} : vector<50x2xf32> to vector<50x1xf32>
    %29 = vector.extract_strided_slice %27 {offsets = [0, 0], sizes = [1, 256], strides = [1, 1]} : vector<2x256xf32> to vector<1x256xf32>
    %30 = vector.broadcast %28 : vector<50x1xf32> to vector<50x256xf32>
    %31 = vector.broadcast %29 : vector<1x256xf32> to vector<50x256xf32>
    %32 = arith.mulf %30, %31 : vector<50x256xf32>
    %33 = arith.addf %3, %32 : vector<50x256xf32>
    %34 = vector.extract_strided_slice %0 {offsets = [0, 1], sizes = [50, 1], strides = [1, 1]} : vector<50x2xf32> to vector<50x1xf32>
    %35 = vector.extract_strided_slice %27 {offsets = [1, 0], sizes = [1, 256], strides = [1, 1]} : vector<2x256xf32> to vector<1x256xf32>
    %36 = vector.broadcast %34 : vector<50x1xf32> to vector<50x256xf32>
    %37 = vector.broadcast %35 : vector<1x256xf32> to vector<50x256xf32>
    %38 = arith.mulf %36, %37 : vector<50x256xf32>
    %39 = arith.addf %33, %38 : vector<50x256xf32>
    %cst_11 = arith.constant 0.000000e+00 : f32
    %40 = vector.broadcast %cst_11 : f32 to vector<50x256xf32>
    %41 = arith.cmpf ogt, %39, %40 : vector<50x256xf32>
    %cst_12 = arith.constant 3.06547666 : f32
    %42 = vector.broadcast %cst_12 : f32 to vector<50x256xf32>
    %43 = arith.mulf %39, %42 : vector<50x256xf32>
    %44 = arith.select %41, %39, %43 : vector<50x256xi1>, vector<50x256xf32>
    %c1_13 = arith.constant 1 : index
    %c0_14 = arith.constant 0 : index
    %c0_15 = arith.constant 0 : index
    %45 = vector.load %arg2[%c1_13, %c0_14, %c0_15] : memref<2x50x256xf32, #tpu.memory_space<vmem>>, vector<1x50x256xf32>
    %46 = vector.shape_cast %45 : vector<1x50x256xf32> to vector<50x256xf32>
    %47 = vector.shape_cast %44 : vector<50x256xf32> to vector<1x50x256xf32>
    tpu.vector_store %arg2[%c1_13, %c0_14, %c0_15], %47 {strides = array<i32>} : memref<2x50x256xf32, #tpu.memory_space<vmem>>, vector<1x50x256xf32>,
    return
  }
}

</mosaic_0001>

<llo_original>
// kernel: tpu_custom_call.1
$region0: #{tpu_custom_call.1}
  #allocation0 [shape = 'u32[]', space=smem, size = 0x4, offset = 0x4, fixed_abs, tag = 'smem constant byte address 0x4 - core index']
  #allocation1 [shape = 'u32[72,128]{1,0:T(1,128)}', space=vmem, size = 0x9000, scoped, tag = 'internal scratch']
  %s0 = inlined_call_operand.vmem [shape: f32[2,2,256], index: 0, kind: input, shape index: {}]
  %s1 = inlined_call_operand.vmem [shape: f32[50,3], index: 1, kind: input, shape index: {}]
  %s2 = inlined_call_operand.vmem [shape: f32[2,50,256], index: 2, kind: output, shape index: {}]
  %s3 = sld [smem:[#allocation0]]
  $region18: #{tpu_custom_call.1} parent=0
    _
  %s5 = ssub.s32 1, %s3
  %s6 = scalar_select 0, %s5, %s3
  // Predicated region
  $region2: #{tpu_custom_call.1} parent=0 // pred_check
    _
  $region3: #{tpu_custom_call.1} parent=0 // pred_check_branch
    %8 = sbr.rel (0) target = $region5
  $region4: #{tpu_custom_call.1} parent=0 // pred_region
    _
  $region5: #{tpu_custom_call.1} parent=0 // pred_fallthru
    _
  // Predicated region
  $region6: #{tpu_custom_call.1} parent=0 // pred_check
    _
  $region7: #{tpu_custom_call.1} parent=0 // pred_check_branch
    %10 = sbr.rel (0) target = $region9
  $region8: #{tpu_custom_call.1} parent=0 // pred_region
    _
  $region9: #{tpu_custom_call.1} parent=0 // pred_fallthru
    _
  %v11 = vld [vmem:[%s1] sm:$0xff]
  %v12 = vld [vmem:[%s1 + $0x8] sm:$0xff]
  %v13 = vld [vmem:[%s1 + $0x10] sm:$0xff]
  %v14 = vld [vmem:[%s1 + $0x18] sm:$0xff]
  %v15 = vld [vmem:[%s1 + $0x20] sm:$0xff]
  %v16 = vld [vmem:[%s1 + $0x28] sm:$0xff]
  %v17 = vld [vmem:[%s1 + $0x30] sm:$0x3]
  %19 = vset.pattern.permute.xlu0 2
  %20 = vperm.xlu0 %19, %v11
  %v21 = vpop.permute.xlu0 %20
  %24 = vset.pattern.permute.xlu0 2
  %25 = vperm.xlu0 %24, %v12
  %v26 = vpop.permute.xlu0 %25
  %29 = vset.pattern.permute.xlu0 2
  %30 = vperm.xlu0 %29, %v13
  %v31 = vpop.permute.xlu0 %30
  %34 = vset.pattern.permute.xlu0 2
  %35 = vperm.xlu0 %34, %v14
  %v36 = vpop.permute.xlu0 %35
  %39 = vset.pattern.permute.xlu0 2
  %40 = vperm.xlu0 %39, %v15
  %v41 = vpop.permute.xlu0 %40
  %44 = vset.pattern.permute.xlu0 2
  %45 = vperm.xlu0 %44, %v16
  %v46 = vpop.permute.xlu0 %45
  %49 = vset.pattern.permute.xlu0 2
  %50 = vperm.xlu0 %49, %v17
  %v51 = vpop.permute.xlu0 %50
  %v53 = vld [vmem:[%s0] sm:$0xf]
  %54 = vset.pattern.permute.xlu0 0
  %55 = vperm.xlu0 %54, %v11
  %v56 = vpop.permute.xlu0 %55
  %58 = vset.pattern.permute.xlu0 0
  %59 = vperm.xlu0 %58, %v12
  %v60 = vpop.permute.xlu0 %59
  %62 = vset.pattern.permute.xlu0 0
  %63 = vperm.xlu0 %62, %v13
  %v64 = vpop.permute.xlu0 %63
  %66 = vset.pattern.permute.xlu0 0
  %67 = vperm.xlu0 %66, %v14
  %v68 = vpop.permute.xlu0 %67
  %70 = vset.pattern.permute.xlu0 0
  %71 = vperm.xlu0 %70, %v15
  %v72 = vpop.permute.xlu0 %71
  %74 = vset.pattern.permute.xlu0 0
  %75 = vperm.xlu0 %74, %v16
  %v76 = vpop.permute.xlu0 %75
  %78 = vset.pattern.permute.xlu0 0
  %79 = vperm.xlu0 %78, %v17
  %v80 = vpop.permute.xlu0 %79
  %v83 = vperm.slane %v53, 0
  %v84 = vperm.slane %v53, 2
  %v87 = vperm.slane %v83, 0
  %v88 = vperm.slane %v84, 0
  %v89 = vmul.f32 %v56, %v87
  %v90 = vmul.f32 %v56, %v88
  %v91 = vmul.f32 %v60, %v87
  %v92 = vmul.f32 %v60, %v88
  %v93 = vmul.f32 %v64, %v87
  %v94 = vmul.f32 %v64, %v88
  %v95 = vmul.f32 %v68, %v87
  %v96 = vmul.f32 %v68, %v88
  %v97 = vmul.f32 %v72, %v87
  %v98 = vmul.f32 %v72, %v88
  %v99 = vmul.f32 %v76, %v87
  %v100 = vmul.f32 %v76, %v88
  %v101 = vmul.f32 %v80, %v87
  %v102 = vmul.f32 %v80, %v88
  %v103 = vadd.f32 %v21, %v89
  %v104 = vadd.f32 %v21, %v90
  %v105 = vadd.f32 %v26, %v91
  %v106 = vadd.f32 %v26, %v92
  %v107 = vadd.f32 %v31, %v93
  %v108 = vadd.f32 %v31, %v94
  %v109 = vadd.f32 %v36, %v95
  %v110 = vadd.f32 %v36, %v96
  %v111 = vadd.f32 %v41, %v97
  %v112 = vadd.f32 %v41, %v98
  %v113 = vadd.f32 %v46, %v99
  %v114 = vadd.f32 %v46, %v100
  %v115 = vadd.f32 %v51, %v101
  %v116 = vadd.f32 %v51, %v102
  %117 = vset.pattern.permute.xlu0 1
  %118 = vperm.xlu0 %117, %v11
  %v119 = vpop.permute.xlu0 %118
  %121 = vset.pattern.permute.xlu0 1
  %122 = vperm.xlu0 %121, %v12
  %v123 = vpop.permute.xlu0 %122
  %125 = vset.pattern.permute.xlu0 1
  %126 = vperm.xlu0 %125, %v13
  %v127 = vpop.permute.xlu0 %126
  %129 = vset.pattern.permute.xlu0 1
  %130 = vperm.xlu0 %129, %v14
  %v131 = vpop.permute.xlu0 %130
  %133 = vset.pattern.permute.xlu0 1
  %134 = vperm.xlu0 %133, %v15
  %v135 = vpop.permute.xlu0 %134
  %137 = vset.pattern.permute.xlu0 1
  %138 = vperm.xlu0 %137, %v16
  %v139 = vpop.permute.xlu0 %138
  %141 = vset.pattern.permute.xlu0 1
  %142 = vperm.xlu0 %141, %v17
  %v143 = vpop.permute.xlu0 %142
  %v145 = vperm.slane %v53, 1
  %v146 = vperm.slane %v53, 3
  %v149 = vperm.slane %v145, 1
  %v150 = vperm.slane %v146, 1
  %v151 = vmul.f32 %v119, %v149
  %v152 = vmul.f32 %v119, %v150
  %v153 = vmul.f32 %v123, %v149
  %v154 = vmul.f32 %v123, %v150
  %v155 = vmul.f32 %v127, %v149
  %v156 = vmul.f32 %v127, %v150
  %v157 = vmul.f32 %v131, %v149
  %v158 = vmul.f32 %v131, %v150
  %v159 = vmul.f32 %v135, %v149
  %v160 = vmul.f32 %v135, %v150
  %v161 = vmul.f32 %v139, %v149
  %v162 = vmul.f32 %v139, %v150
  %v163 = vmul.f32 %v143, %v149
  %v164 = vmul.f32 %v143, %v150
  %v165 = vadd.f32 %v103, %v151
  %v166 = vadd.f32 %v104, %v152
  %v167 = vadd.f32 %v105, %v153
  %v168 = vadd.f32 %v106, %v154
  %v169 = vadd.f32 %v107, %v155
  %v170 = vadd.f32 %v108, %v156
  %v171 = vadd.f32 %v109, %v157
  %v172 = vadd.f32 %v110, %v158
  %v173 = vadd.f32 %v111, %v159
  %v174 = vadd.f32 %v112, %v160
  %v175 = vadd.f32 %v113, %v161
  %v176 = vadd.f32 %v114, %v162
  %v177 = vadd.f32 %v115, %v163
  %v178 = vadd.f32 %v116, %v164
  %vm179 = vcmp.gt.f32.partialorder %v165, 0.0
  %vm180 = vcmp.gt.f32.partialorder %v166, 0.0
  %vm181 = vcmp.gt.f32.partialorder %v167, 0.0
  %vm182 = vcmp.gt.f32.partialorder %v168, 0.0
  %vm183 = vcmp.gt.f32.partialorder %v169, 0.0
  %vm184 = vcmp.gt.f32.partialorder %v170, 0.0
  %vm185 = vcmp.gt.f32.partialorder %v171, 0.0
  %vm186 = vcmp.gt.f32.partialorder %v172, 0.0
  %vm187 = vcmp.gt.f32.partialorder %v173, 0.0
  %vm188 = vcmp.gt.f32.partialorder %v174, 0.0
  %vm189 = vcmp.gt.f32.partialorder %v175, 0.0
  %vm190 = vcmp.gt.f32.partialorder %v176, 0.0
  %vm191 = vcmp.gt.f32.partialorder %v177, 0.0
  %vm192 = vcmp.gt.f32.partialorder %v178, 0.0
  %v193 = vmul.f32 %v165, 3.0654767
  %v194 = vmul.f32 %v166, 3.0654767
  %v195 = vmul.f32 %v167, 3.0654767
  %v196 = vmul.f32 %v168, 3.0654767
  %v197 = vmul.f32 %v169, 3.0654767
  %v198 = vmul.f32 %v170, 3.0654767
  %v199 = vmul.f32 %v171, 3.0654767
  %v200 = vmul.f32 %v172, 3.0654767
  %v201 = vmul.f32 %v173, 3.0654767
  %v202 = vmul.f32 %v174, 3.0654767
  %v203 = vmul.f32 %v175, 3.0654767
  %v204 = vmul.f32 %v176, 3.0654767
  %v205 = vmul.f32 %v177, 3.0654767
  %v206 = vmul.f32 %v178, 3.0654767
  %v207 = vsel %vm179, %v165, %v193
  %v208 = vsel %vm180, %v166, %v194
  %v209 = vsel %vm181, %v167, %v195
  %v210 = vsel %vm182, %v168, %v196
  %v211 = vsel %vm183, %v169, %v197
  %v212 = vsel %vm184, %v170, %v198
  %v213 = vsel %vm185, %v171, %v199
  %v214 = vsel %vm186, %v172, %v200
  %v215 = vsel %vm187, %v173, %v201
  %v216 = vsel %vm188, %v174, %v202
  %v217 = vsel %vm189, %v175, %v203
  %v218 = vsel %vm190, %v176, %v204
  %v219 = vsel %vm191, %v177, %v205
  %v220 = vsel %vm192, %v178, %v206
  %221 = vst [vmem:[%s2] sm:$0xff] %v207
  %222 = vst [vmem:[%s2 + $0x8] sm:$0xff] %v208
  %223 = vst [vmem:[%s2 + $0x10] sm:$0xff] %v209
  %224 = vst [vmem:[%s2 + $0x18] sm:$0xff] %v210
  %225 = vst [vmem:[%s2 + $0x20] sm:$0xff] %v211
  %226 = vst [vmem:[%s2 + $0x28] sm:$0xff] %v212
  %227 = vst [vmem:[%s2 + $0x30] sm:$0xff] %v213
  %228 = vst [vmem:[%s2 + $0x38] sm:$0xff] %v214
  %229 = vst [vmem:[%s2 + $0x40] sm:$0xff] %v215
  %230 = vst [vmem:[%s2 + $0x48] sm:$0xff] %v216
  %231 = vst [vmem:[%s2 + $0x50] sm:$0xff] %v217
  %232 = vst [vmem:[%s2 + $0x58] sm:$0xff] %v218
  %233 = vst [vmem:[%s2 + $0x60] sm:$0x3] %v219
  %234 = vst [vmem:[%s2 + $0x68] sm:$0x3] %v220
  %s235 = scalar_lea.vmem %s0, 4
  %v236 = vld [vmem:[%s235] sm:$0xf]
  %v238 = vperm.slane %v236, 0
  %v239 = vperm.slane %v236, 2
  %v242 = vperm.slane %v238, 0
  %v243 = vperm.slane %v239, 0
  %v244 = vmul.f32 %v56, %v242
  %v245 = vmul.f32 %v56, %v243
  %v246 = vmul.f32 %v60, %v242
  %v247 = vmul.f32 %v60, %v243
  %v248 = vmul.f32 %v64, %v242
  %v249 = vmul.f32 %v64, %v243
  %v250 = vmul.f32 %v68, %v242
  %v251 = vmul.f32 %v68, %v243
  %v252 = vmul.f32 %v72, %v242
  %v253 = vmul.f32 %v72, %v243
  %v254 = vmul.f32 %v76, %v242
  %v255 = vmul.f32 %v76, %v243
  %v256 = vmul.f32 %v80, %v242
  %v257 = vmul.f32 %v80, %v243
  %v258 = vadd.f32 %v21, %v244
  %v259 = vadd.f32 %v21, %v245
  %v260 = vadd.f32 %v26, %v246
  %v261 = vadd.f32 %v26, %v247
  %v262 = vadd.f32 %v31, %v248
  %v263 = vadd.f32 %v31, %v249
  %v264 = vadd.f32 %v36, %v250
  %v265 = vadd.f32 %v36, %v251
  %v266 = vadd.f32 %v41, %v252
  %v267 = vadd.f32 %v41, %v253
  %v268 = vadd.f32 %v46, %v254
  %v269 = vadd.f32 %v46, %v255
  %v270 = vadd.f32 %v51, %v256
  %v271 = vadd.f32 %v51, %v257
  %v272 = vperm.slane %v236, 1
  %v273 = vperm.slane %v236, 3
  %v276 = vperm.slane %v272, 1
  %v277 = vperm.slane %v273, 1
  %v278 = vmul.f32 %v119, %v276
  %v279 = vmul.f32 %v119, %v277
  %v280 = vmul.f32 %v123, %v276
  %v281 = vmul.f32 %v123, %v277
  %v282 = vmul.f32 %v127, %v276
  %v283 = vmul.f32 %v127, %v277
  %v284 = vmul.f32 %v131, %v276
  %v285 = vmul.f32 %v131, %v277
  %v286 = vmul.f32 %v135, %v276
  %v287 = vmul.f32 %v135, %v277
  %v288 = vmul.f32 %v139, %v276
  %v289 = vmul.f32 %v139, %v277
  %v290 = vmul.f32 %v143, %v276
  %v291 = vmul.f32 %v143, %v277
  %v292 = vadd.f32 %v258, %v278
  %v293 = vadd.f32 %v259, %v279
  %v294 = vadd.f32 %v260, %v280
  %v295 = vadd.f32 %v261, %v281
  %v296 = vadd.f32 %v262, %v282
  %v297 = vadd.f32 %v263, %v283
  %v298 = vadd.f32 %v264, %v284
  %v299 = vadd.f32 %v265, %v285
  %v300 = vadd.f32 %v266, %v286
  %v301 = vadd.f32 %v267, %v287
  %v302 = vadd.f32 %v268, %v288
  %v303 = vadd.f32 %v269, %v289
  %v304 = vadd.f32 %v270, %v290
  %v305 = vadd.f32 %v271, %v291
  %vm306 = vcmp.gt.f32.partialorder %v292, 0.0
  %vm307 = vcmp.gt.f32.partialorder %v293, 0.0
  %vm308 = vcmp.gt.f32.partialorder %v294, 0.0
  %vm309 = vcmp.gt.f32.partialorder %v295, 0.0
  %vm310 = vcmp.gt.f32.partialorder %v296, 0.0
  %vm311 = vcmp.gt.f32.partialorder %v297, 0.0
  %vm312 = vcmp.gt.f32.partialorder %v298, 0.0
  %vm313 = vcmp.gt.f32.partialorder %v299, 0.0
  %vm314 = vcmp.gt.f32.partialorder %v300, 0.0
  %vm315 = vcmp.gt.f32.partialorder %v301, 0.0
  %vm316 = vcmp.gt.f32.partialorder %v302, 0.0
  %vm317 = vcmp.gt.f32.partialorder %v303, 0.0
  %vm318 = vcmp.gt.f32.partialorder %v304, 0.0
  %vm319 = vcmp.gt.f32.partialorder %v305, 0.0
  %v320 = vmul.f32 %v292, 3.0654767
  %v321 = vmul.f32 %v293, 3.0654767
  %v322 = vmul.f32 %v294, 3.0654767
  %v323 = vmul.f32 %v295, 3.0654767
  %v324 = vmul.f32 %v296, 3.0654767
  %v325 = vmul.f32 %v297, 3.0654767
  %v326 = vmul.f32 %v298, 3.0654767
  %v327 = vmul.f32 %v299, 3.0654767
  %v328 = vmul.f32 %v300, 3.0654767
  %v329 = vmul.f32 %v301, 3.0654767
  %v330 = vmul.f32 %v302, 3.0654767
  %v331 = vmul.f32 %v303, 3.0654767
  %v332 = vmul.f32 %v304, 3.0654767
  %v333 = vmul.f32 %v305, 3.0654767
  %v334 = vsel %vm306, %v292, %v320
  %v335 = vsel %vm307, %v293, %v321
  %v336 = vsel %vm308, %v294, %v322
  %v337 = vsel %vm309, %v295, %v323
  %v338 = vsel %vm310, %v296, %v324
  %v339 = vsel %vm311, %v297, %v325
  %v340 = vsel %vm312, %v298, %v326
  %v341 = vsel %vm313, %v299, %v327
  %v342 = vsel %vm314, %v300, %v328
  %v343 = vsel %vm315, %v301, %v329
  %v344 = vsel %vm316, %v302, %v330
  %v345 = vsel %vm317, %v303, %v331
  %v346 = vsel %vm318, %v304, %v332
  %v347 = vsel %vm319, %v305, %v333
  %s348 = scalar_lea.vmem %s2, 112
  %349 = vst [vmem:[%s348] sm:$0xff] %v334
  %350 = vst [vmem:[%s348 + $0x8] sm:$0xff] %v335
  %351 = vst [vmem:[%s348 + $0x10] sm:$0xff] %v336
  %352 = vst [vmem:[%s348 + $0x18] sm:$0xff] %v337
  %353 = vst [vmem:[%s348 + $0x20] sm:$0xff] %v338
  %354 = vst [vmem:[%s348 + $0x28] sm:$0xff] %v339
  %355 = vst [vmem:[%s348 + $0x30] sm:$0xff] %v340
  %356 = vst [vmem:[%s348 + $0x38] sm:$0xff] %v341
  %357 = vst [vmem:[%s348 + $0x40] sm:$0xff] %v342
  %358 = vst [vmem:[%s348 + $0x48] sm:$0xff] %v343
  %359 = vst [vmem:[%s348 + $0x50] sm:$0xff] %v344
  %360 = vst [vmem:[%s348 + $0x58] sm:$0xff] %v345
  %361 = vst [vmem:[%s348 + $0x60] sm:$0x3] %v346
  %362 = vst [vmem:[%s348 + $0x68] sm:$0x3] %v347
  // Predicated region
  $region10: #{tpu_custom_call.1} parent=0 // pred_check
    _
  $region11: #{tpu_custom_call.1} parent=0 // pred_check_branch
    %364 = sbr.rel (0) target = $region13
  $region12: #{tpu_custom_call.1} parent=0 // pred_region
    _
  $region13: #{tpu_custom_call.1} parent=0 // pred_fallthru
    _
  // Predicated region
  $region14: #{tpu_custom_call.1} parent=0 // pred_check
    _
  $region15: #{tpu_custom_call.1} parent=0 // pred_check_branch
    %366 = sbr.rel (0) target = $region17
  $region16: #{tpu_custom_call.1} parent=0 // pred_region
    _
  $region17: #{tpu_custom_call.1} parent=0 // pred_fallthru
    _

</llo_original>
